<compile_context>
chip_gen: v5e
topology: v5e:2x2
jax: 0.10.0
libtpu: 0.0.40
codegen_flags: <defaults>
</compile_context>

<pallas_src>
import functools

import jax
import jax.numpy as jnp
from jax import lax
from jax.experimental import pallas as pl
from jax.experimental.pallas import tpu as pltpu

LANES = 128
SUBLANES = 8


def f_cons_kernel(z_ref, w0_ref, b0_ref, w1_ref, b1_ref, o_ref, *,
                  hidden, tanh_dtype=jnp.float32, unroll_limit=32):
    # z_ref:  (block_rows, 128) lane-dense batch slab (VMEM, caller's dtype)
    # w0_ref: (H,)  first-layer weights   (SMEM scalars, f32)
    # b0_ref: (H,)  first-layer biases    (SMEM scalars, f32)
    # w1_ref: (H,)  output-layer weights  (SMEM scalars, f32)
    # b1_ref: (1,)  output-layer bias     (SMEM scalar,  f32)
    z = z_ref[...].astype(jnp.float32)
    lower_tanh = jnp.dtype(tanh_dtype) != jnp.dtype(jnp.float32)

    def term(h):
        pre = w0_ref[h] * z + b0_ref[h]
        if lower_tanh:
            # Only worthwhile when EUP-bound (large H) on v6e/v7x; never v5e.
            pre = pre.astype(tanh_dtype)
        return w1_ref[h] * jnp.tanh(pre).astype(jnp.float32)

    if hidden <= unroll_limit:
        # Small H: full unroll, acc initialized from the h=0 term.
        acc = term(0)
        for h in range(1, hidden):
            acc = acc + term(h)
    else:
        # Large H: bounded unroll to avoid bundle-stream bloat; EUP is the
        # serial bottleneck there anyway.
        acc = lax.fori_loop(1, hidden, lambda h, a: a + term(h), term(0),
                            unroll=8)

    # Fold the output bias into the final store expression.
    o_ref[...] = (acc + b1_ref[0]).astype(o_ref.dtype)


def f_cons_forward(z, w0, b0, w1, b1, *, block_rows=4096,
                   tanh_dtype=jnp.float32, unroll_limit=32,
                   return_slab=False):
    """z: [B, 1]; w0: [H, 1]; b0: [H]; w1: [1, H]; b1: [1] -> [B, 1].

    If return_slab=True, returns the raw (rows_rounded, 128) lane-dense slab
    (row-major flattened batch, padded with garbage past B) so callers that
    can consume that layout skip the un-pad slice pass.
    """
    B = z.shape[0]
    H = w0.shape[0]
    dtype = z.dtype

    # Pad rows only to the 8-row sublane boundary (not to a block multiple).
    rows_needed = pl.cdiv(B, LANES)
    rows_rounded = pl.cdiv(rows_needed, SUBLANES) * SUBLANES
    b_padded = rows_rounded * LANES

    # Tile choice: as large as requested, but never bigger than the slab.
    block_rows = max(SUBLANES, min(block_rows, rows_rounded))
    # Guarantee >= 2 grid steps when possible so the "parallel" batch axis can
    # shard across both TensorCores on v7x (no-op on 1-TC v5e/v6e).
    if rows_rounded >= 2 * SUBLANES:
        half = max(SUBLANES, (rows_rounded // 2) // SUBLANES * SUBLANES)
        block_rows = min(block_rows, half)
    grid = (pl.cdiv(rows_rounded, block_rows),)  # partial last block is masked

    # Lane-dense slab in the caller's dtype; skip the pad copy when the batch
    # already fills the slab exactly (reshape of contiguous data is free).
    z_flat = jnp.ravel(z)
    pad = b_padded - B
    if pad:
        z_flat = jnp.pad(z_flat, (0, pad))
    z_slab = z_flat.reshape(rows_rounded, LANES)

    # Tiny parameters as flat f32 arrays for SMEM scalar reads.
    # (If calling repeatedly with fixed weights, hoist these 4 flattens out.)
    w0f = jnp.ravel(w0).astype(jnp.float32)   # (H,)
    b0f = jnp.ravel(b0).astype(jnp.float32)   # (H,)
    w1f = jnp.ravel(w1).astype(jnp.float32)   # (H,)
    b1f = jnp.ravel(b1).astype(jnp.float32)   # (1,)

    smem = pl.BlockSpec(memory_space=pltpu.MemorySpace.SMEM)
    itemsize = jnp.dtype(dtype).itemsize

    out_slab = pl.pallas_call(
        functools.partial(f_cons_kernel, hidden=H, tanh_dtype=tanh_dtype,
                          unroll_limit=unroll_limit),
        out_shape=jax.ShapeDtypeStruct((rows_rounded, LANES), dtype),
        grid=grid,
        in_specs=[
            pl.BlockSpec((block_rows, LANES), lambda i: (i, 0)),  # z slab
            smem, smem, smem, smem,                               # params
        ],
        out_specs=pl.BlockSpec((block_rows, LANES), lambda i: (i, 0)),
        compiler_params=pltpu.CompilerParams(
            dimension_semantics=("parallel",),
            # Double-buffered in+out at the default tile is <= 8 MiB (f32);
            # raise the scoped limit so v5e's 16 MiB default has headroom too.
            vmem_limit_bytes=32 * 1024 * 1024),
        cost_estimate=pl.CostEstimate(
            flops=4 * H * b_padded,               # ~2 mul + 2 add per hidden unit
            transcendentals=H * b_padded,
            bytes_accessed=2 * itemsize * b_padded),
    )(z_slab, w0f, b0f, w1f, b1f)

    if return_slab:
        return out_slab
    if pad:
        return out_slab.reshape(-1)[:B].reshape(B, 1)
    return out_slab.reshape(B, 1)


def f_cons_reference(z, w0, b0, w1, b1):
    h = z @ w0.T + b0[None, :]
    h = jnp.tanh(h)
    return h @ w1.T + b1[None, :]


def _make_params(key, hidden):
    k_w0, k_w1 = jax.random.split(key, 2)
    # Matches nn.init.normal_(std=1e-4), bias = 0.
    w0 = 1e-4 * jax.random.normal(k_w0, (hidden, 1), dtype=jnp.float32)
    b0 = jnp.zeros((hidden,), dtype=jnp.float32)
    w1 = 1e-4 * jax.random.normal(k_w1, (1, hidden), dtype=jnp.float32)
    b1 = jnp.zeros((1,), dtype=jnp.float32)
    return w0, b0, w1, b1


if __name__ == "__main__":
    key = jax.random.PRNGKey(0)
    k_small, k_big, k_deep = jax.random.split(key, 3)

    # 1) Module-sized case: batch=8, hidden_nodes=[4] (single grid step).
    H = 4
    k_z, k_p = jax.random.split(k_small)
    w0, b0, w1, b1 = _make_params(k_p, H)
    z = jax.random.normal(k_z, (8, 1), dtype=jnp.float32)
    out = jax.block_until_ready(f_cons_forward(z, w0, b0, w1, b1))
    ref = f_cons_reference(z, w0, b0, w1, b1)
    assert out.shape == (8, 1)
    assert jnp.allclose(out, ref, atol=1e-6, rtol=1e-5)

    # 2) Larger batch: exercises multi-step grid, the >=2-step (v7x) cap,
    #    8-row-only padding and the masked partial last block.
    k_z, k_p = jax.random.split(k_big)
    w0b, b0b, w1b, b1b = _make_params(k_p, H)
    zb = jax.random.normal(k_z, (5115, 1), dtype=jnp.float32)
    outb = jax.block_until_ready(f_cons_forward(zb, w0b, b0b, w1b, b1b,
                                                block_rows=16))
    refb = f_cons_reference(zb, w0b, b0b, w1b, b1b)
    assert outb.shape == (5115, 1)
    assert jnp.allclose(outb, refb, atol=1e-6, rtol=1e-5)

    # 3) Large-H path: bounded-unroll fori_loop with dynamic SMEM param reads.
    Hd = 48
    k_z, k_p = jax.random.split(k_deep)
    w0d, b0d, w1d, b1d = _make_params(k_p, Hd)
    zd = jax.random.normal(k_z, (256, 1), dtype=jnp.float32)
    outd = jax.block_until_ready(f_cons_forward(zd, w0d, b0d, w1d, b1d))
    refd = f_cons_reference(zd, w0d, b0d, w1d, b1d)
    assert outd.shape == (256, 1)
    assert jnp.allclose(outd, refd, atol=1e-6, rtol=1e-5)

    print("KERNEL_OK")
</pallas_src>

<mosaic_0001>
module attributes {stable_mosaic.version = 11 : i64} {
  func.func @f_cons_kernel(%arg0: i32, %arg1: memref<8x128xf32, #tpu.memory_space<vmem>>, %arg2: memref<4xf32, #tpu.memory_space<smem>>, %arg3: memref<4xf32, #tpu.memory_space<smem>>, %arg4: memref<4xf32, #tpu.memory_space<smem>>, %arg5: memref<1xf32, #tpu.memory_space<smem>>, %arg6: memref<8x128xf32, #tpu.memory_space<vmem>>) attributes {dimension_semantics = [#tpu.dimension_semantics<parallel>], iteration_bounds = array<i64: 1>, scalar_prefetch = 0 : i64, scratch_operands = 0 : i64, tpu.core_type = #tpu.core_type<tc>, window_params = [{transform_indices = @transform_0, window_bounds = array<i64: 8, 128>}, {transform_indices = @transform_1, window_bounds = array<i64: 4>}, {transform_indices = @transform_2, window_bounds = array<i64: 4>}, {transform_indices = @transform_3, window_bounds = array<i64: 4>}, {transform_indices = @transform_4, window_bounds = array<i64: 1>}, {transform_indices = @transform_5, window_bounds = array<i64: 8, 128>}]} {
    %c0 = arith.constant 0 : index
    %c0_0 = arith.constant 0 : index
    %0 = vector.load %arg1[%c0, %c0_0] : memref<8x128xf32, #tpu.memory_space<vmem>>, vector<8x128xf32>
    %c0_1 = arith.constant 0 : index
    %1 = memref.load %arg2[%c0_1] : memref<4xf32, #tpu.memory_space<smem>>
    %2 = vector.broadcast %1 : f32 to vector<8x128xf32>
    %3 = arith.mulf %2, %0 : vector<8x128xf32>
    %c0_2 = arith.constant 0 : index
    %4 = memref.load %arg3[%c0_2] : memref<4xf32, #tpu.memory_space<smem>>
    %5 = vector.broadcast %4 : f32 to vector<8x128xf32>
    %6 = arith.addf %3, %5 : vector<8x128xf32>
    %c0_3 = arith.constant 0 : index
    %7 = memref.load %arg4[%c0_3] : memref<4xf32, #tpu.memory_space<smem>>
    %8 = math.tanh %6 : vector<8x128xf32>
    %9 = vector.broadcast %7 : f32 to vector<8x128xf32>
    %10 = arith.mulf %9, %8 : vector<8x128xf32>
    %c1 = arith.constant 1 : index
    %11 = memref.load %arg2[%c1] : memref<4xf32, #tpu.memory_space<smem>>
    %12 = vector.broadcast %11 : f32 to vector<8x128xf32>
    %13 = arith.mulf %12, %0 : vector<8x128xf32>
    %c1_4 = arith.constant 1 : index
    %14 = memref.load %arg3[%c1_4] : memref<4xf32, #tpu.memory_space<smem>>
    %15 = vector.broadcast %14 : f32 to vector<8x128xf32>
    %16 = arith.addf %13, %15 : vector<8x128xf32>
    %c1_5 = arith.constant 1 : index
    %17 = memref.load %arg4[%c1_5] : memref<4xf32, #tpu.memory_space<smem>>
    %18 = math.tanh %16 : vector<8x128xf32>
    %19 = vector.broadcast %17 : f32 to vector<8x128xf32>
    %20 = arith.mulf %19, %18 : vector<8x128xf32>
    %21 = arith.addf %10, %20 : vector<8x128xf32>
    %c2 = arith.constant 2 : index
    %22 = memref.load %arg2[%c2] : memref<4xf32, #tpu.memory_space<smem>>
    %23 = vector.broadcast %22 : f32 to vector<8x128xf32>
    %24 = arith.mulf %23, %0 : vector<8x128xf32>
    %c2_6 = arith.constant 2 : index
    %25 = memref.load %arg3[%c2_6] : memref<4xf32, #tpu.memory_space<smem>>
    %26 = vector.broadcast %25 : f32 to vector<8x128xf32>
    %27 = arith.addf %24, %26 : vector<8x128xf32>
    %c2_7 = arith.constant 2 : index
    %28 = memref.load %arg4[%c2_7] : memref<4xf32, #tpu.memory_space<smem>>
    %29 = math.tanh %27 : vector<8x128xf32>
    %30 = vector.broadcast %28 : f32 to vector<8x128xf32>
    %31 = arith.mulf %30, %29 : vector<8x128xf32>
    %32 = arith.addf %21, %31 : vector<8x128xf32>
    %c3 = arith.constant 3 : index
    %33 = memref.load %arg2[%c3] : memref<4xf32, #tpu.memory_space<smem>>
    %34 = vector.broadcast %33 : f32 to vector<8x128xf32>
    %35 = arith.mulf %34, %0 : vector<8x128xf32>
    %c3_8 = arith.constant 3 : index
    %36 = memref.load %arg3[%c3_8] : memref<4xf32, #tpu.memory_space<smem>>
    %37 = vector.broadcast %36 : f32 to vector<8x128xf32>
    %38 = arith.addf %35, %37 : vector<8x128xf32>
    %c3_9 = arith.constant 3 : index
    %39 = memref.load %arg4[%c3_9] : memref<4xf32, #tpu.memory_space<smem>>
    %40 = math.tanh %38 : vector<8x128xf32>
    %41 = vector.broadcast %39 : f32 to vector<8x128xf32>
    %42 = arith.mulf %41, %40 : vector<8x128xf32>
    %43 = arith.addf %32, %42 : vector<8x128xf32>
    %c0_10 = arith.constant 0 : index
    %44 = memref.load %arg5[%c0_10] : memref<1xf32, #tpu.memory_space<smem>>
    %45 = vector.broadcast %44 : f32 to vector<8x128xf32>
    %46 = arith.addf %43, %45 : vector<8x128xf32>
    %c0_11 = arith.constant 0 : index
    %c0_12 = arith.constant 0 : index
    %47 = vector.load %arg6[%c0_11, %c0_12] : memref<8x128xf32, #tpu.memory_space<vmem>>, vector<8x128xf32>
    tpu.vector_store %arg6[%c0_11, %c0_12], %46 {strides = array<i32>} : memref<8x128xf32, #tpu.memory_space<vmem>>, vector<8x128xf32>,
    return
  }
  func.func @transform_0(%arg0: i32) -> (i32, i32) {
    %c0_i32 = arith.constant 0 : i32
    %c0_i32_0 = arith.constant 0 : i32
    return %arg0, %c0_i32 : i32, i32
  }
  func.func @transform_1(%arg0: i32) -> i32 {
    %c0_i32 = arith.constant 0 : i32
    %c0_i32_0 = arith.constant 0 : i32
    return %c0_i32 : i32
  }
  func.func @transform_2(%arg0: i32) -> i32 {
    %c0_i32 = arith.constant 0 : i32
    %c0_i32_0 = arith.constant 0 : i32
    return %c0_i32 : i32
  }
  func.func @transform_3(%arg0: i32) -> i32 {
    %c0_i32 = arith.constant 0 : i32
    %c0_i32_0 = arith.constant 0 : i32
    return %c0_i32 : i32
  }
  func.func @transform_4(%arg0: i32) -> i32 {
    %c0_i32 = arith.constant 0 : i32
    %c0_i32_0 = arith.constant 0 : i32
    return %c0_i32 : i32
  }
  func.func @transform_5(%arg0: i32) -> (i32, i32) {
    %c0_i32 = arith.constant 0 : i32
    %c0_i32_0 = arith.constant 0 : i32
    return %arg0, %c0_i32 : i32, i32
  }
}

</mosaic_0001>

<llo_original>
// kernel: tpu_custom_call.1
$region0: #{tpu_custom_call.1}
  #allocation0 [shape = 'u32[]', space=smem, size = 0x4, offset = 0x4, fixed_abs, tag = 'smem constant byte address 0x4 - core index']
  #allocation1 [shape = 'u32[72,128]{1,0:T(1,128)}', space=vmem, size = 0x9000, scoped, tag = 'internal scratch']
  #allocation2 [shape = 'f32[1]{0:T(128)S(6)}', space=smem, size = 0x200, scoped, tag = 'scoped memory for tpu_custom_call.1']
  %s0 = inlined_call_operand.hbm [shape: f32[8,128], index: 0, kind: input, shape index: {}]
  %s1 = inlined_call_operand.vmem [shape: f32[4], index: 1, kind: input, shape index: {}]
  %s2 = inlined_call_operand.vmem [shape: f32[4], index: 2, kind: input, shape index: {}]
  %s3 = inlined_call_operand.vmem [shape: f32[4], index: 3, kind: input, shape index: {}]
  %s4 = inlined_call_operand.<no memory space> [shape: f32[1], index: 4, kind: input, shape index: {}]
  %s5 = inlined_call_operand.hbm [shape: f32[8,128], index: 5, kind: output, shape index: {}]
  %s6 = sld [smem:[#allocation0]]
  $region46: #{tpu_custom_call.1} parent=0
    _
  %s8 = ssub.s32 1, %s6
  %s9 = scalar_select 0, %s8, %s6
  %10 = sst [smem:[#allocation2]] %s4
  $region1: #{tpu_custom_call.1} parent=0
    #allocation3 [shape = 'u8[4096]{0}', space=vmem, size = 0x1000, scoped, tag = 'input window, operand 0, single buffered']
    #allocation4 [shape = 's32[1]{0}', space=sflag, size = 0x4, scoped, tag = 'scoped memory for tpu_custom_call.1']
    #allocation5 [shape = 's32[1]{0}', space=sflag, size = 0x4, scoped, tag = 'scoped memory for tpu_custom_call.1']
    #allocation6 [shape = 's32[1]{0}', space=sflag, size = 0x4, scoped, tag = 'scoped memory for tpu_custom_call.1']
    #allocation7 [shape = 'u8[512]{0}', space=smem, size = 0x200, scoped, tag = 'input window, operand 1, single buffered']
    #allocation8 [shape = 'u8[512]{0}', space=smem, size = 0x200, scoped, tag = 'input window, operand 2, single buffered']
    #allocation9 [shape = 's32[1]{0}', space=sflag, size = 0x4, scoped, tag = 'scoped memory for tpu_custom_call.1']
    #allocation10 [shape = 'u8[512]{0}', space=smem, size = 0x200, scoped, tag = 'input window, operand 3, single buffered']
    #allocation11 [shape = 'u8[4096]{0}', space=vmem, size = 0x1000, scoped, tag = 'output window, operand 0, single buffered']
    %11 = vsyncpa [#allocation4], 0
    %12 = vsyncpa [#allocation6], 0
    %13 = vsyncpa [#allocation9], 0
    %14 = vsyncpa [#allocation5], 0
    // Predicated region
    $region2: #{tpu_custom_call.1} parent=1 // pred_check
      _
    $region3: #{tpu_custom_call.1} parent=1 // pred_check_branch
      %16 = sbr.rel (0) target = $region5
    $region4: #{tpu_custom_call.1} parent=1 // pred_region
      %18 = vsyncadd [#allocation4], 0
      %s20 = sshll.u32 %s0, 4
      %s21 = int_to_ptr.hbm [resolvable:$true] %s20
      %s22 = sshll.u32 [#allocation3], 4
      %s23 = int_to_ptr.vmem [resolvable:$true] %s22
      %25 = dma.hbm_to_vmem [thread:$0]  %s21, 128, %s23, [#allocation4]
    $region5: #{tpu_custom_call.1} parent=1 // pred_fallthru
      _
    // Predicated region
    $region6: #{tpu_custom_call.1} parent=1 // pred_check
      _
    $region7: #{tpu_custom_call.1} parent=1 // pred_check_branch
      %27 = sbr.rel (0) target = $region9
    $region8: #{tpu_custom_call.1} parent=1 // pred_region
      %29 = vsyncadd [#allocation6], 0
      %s31 = sshll.u32 %s1, 4
      %s32 = int_to_ptr.vmem [resolvable:$true] %s31
      %34 = dma.vmem_to_smem %s32, 16, [#allocation7], [#allocation6]
    $region9: #{tpu_custom_call.1} parent=1 // pred_fallthru
      _
    // Predicated region
    $region10: #{tpu_custom_call.1} parent=1 // pred_check
      _
    $region11: #{tpu_custom_call.1} parent=1 // pred_check_branch
      %36 = sbr.rel (0) target = $region13
    $region12: #{tpu_custom_call.1} parent=1 // pred_region
      %38 = vsyncadd [#allocation9], 0
      %s40 = sshll.u32 %s2, 4
      %s41 = int_to_ptr.vmem [resolvable:$true] %s40
      %43 = dma.vmem_to_smem %s41, 16, [#allocation8], [#allocation9]
    $region13: #{tpu_custom_call.1} parent=1 // pred_fallthru
      _
    // Predicated region
    $region14: #{tpu_custom_call.1} parent=1 // pred_check
      _
    $region15: #{tpu_custom_call.1} parent=1 // pred_check_branch
      %45 = sbr.rel (0) target = $region17
    $region16: #{tpu_custom_call.1} parent=1 // pred_region
      %47 = vsyncadd [#allocation9], 0
      %s49 = sshll.u32 %s3, 4
      %s50 = int_to_ptr.vmem [resolvable:$true] %s49
      %52 = dma.vmem_to_smem %s50, 16, [#allocation10], [#allocation9]
    $region17: #{tpu_custom_call.1} parent=1 // pred_fallthru
      _
    // Predicated region
    $region18: #{tpu_custom_call.1} parent=1 // pred_check
      _
    $region19: #{tpu_custom_call.1} parent=1 // pred_check_branch
      %54 = sbr.rel (0) target = $region21
    $region20: #{tpu_custom_call.1} parent=1 // pred_region
      _
    $region21: #{tpu_custom_call.1} parent=1 // pred_fallthru
      _
    // Predicated region
    $region22: #{tpu_custom_call.1} parent=1 // pred_check
      _
    $region23: #{tpu_custom_call.1} parent=1 // pred_check_branch
      %56 = sbr.rel (0) target = $region25
    $region24: #{tpu_custom_call.1} parent=1 // pred_region
      %58 = dma.done [#allocation4], 128
    $region25: #{tpu_custom_call.1} parent=1 // pred_fallthru
      _
    // Predicated region
    $region26: #{tpu_custom_call.1} parent=1 // pred_check
      _
    $region27: #{tpu_custom_call.1} parent=1 // pred_check_branch
      %60 = sbr.rel (0) target = $region29
    $region28: #{tpu_custom_call.1} parent=1 // pred_region
      %62 = dma.done [#allocation6], 16
    $region29: #{tpu_custom_call.1} parent=1 // pred_fallthru
      _
    // Predicated region
    $region30: #{tpu_custom_call.1} parent=1 // pred_check
      _
    $region31: #{tpu_custom_call.1} parent=1 // pred_check_branch
      %64 = sbr.rel (0) target = $region33
    $region32: #{tpu_custom_call.1} parent=1 // pred_region
      %66 = dma.done [#allocation9], 16
    $region33: #{tpu_custom_call.1} parent=1 // pred_fallthru
      _
    // Predicated region
    $region34: #{tpu_custom_call.1} parent=1 // pred_check
      _
    $region35: #{tpu_custom_call.1} parent=1 // pred_check_branch
      %68 = sbr.rel (0) target = $region37
    $region36: #{tpu_custom_call.1} parent=1 // pred_region
      %70 = dma.done [#allocation9], 16
    $region37: #{tpu_custom_call.1} parent=1 // pred_fallthru
      _
    %71 = sfence
    %v72 = vld [vmem:[#allocation3] sm:$0xff]
    %s73 = sld [smem:[#allocation7]]
    %v74 = vstv %s73
    %v75 = vmul.f32 %v74, %v72
    %s76 = sld [smem:[#allocation8]]
    %v77 = vstv %s76
    %v78 = vadd.f32 %v75, %v77
    %s79 = sld [smem:[#allocation10]]
    %v80 = vtanh.pop %v78
    %v81 = vstv %s79
    %v82 = vmul.f32 %v81, %v80
    %s83 = sld [smem:[#allocation7 + $0x1]]
    %v84 = vstv %s83
    %v85 = vmul.f32 %v84, %v72
    %s86 = sld [smem:[#allocation8 + $0x1]]
    %v87 = vstv %s86
    %v88 = vadd.f32 %v85, %v87
    %s89 = sld [smem:[#allocation10 + $0x1]]
    %v90 = vtanh.pop %v88
    %v91 = vstv %s89
    %v92 = vmul.f32 %v91, %v90
    %v93 = vadd.f32 %v82, %v92
    %s94 = sld [smem:[#allocation7 + $0x2]]
    %v95 = vstv %s94
    %v96 = vmul.f32 %v95, %v72
    %s97 = sld [smem:[#allocation8 + $0x2]]
    %v98 = vstv %s97
    %v99 = vadd.f32 %v96, %v98
    %s100 = sld [smem:[#allocation10 + $0x2]]
    %v101 = vtanh.pop %v99
    %v102 = vstv %s100
    %v103 = vmul.f32 %v102, %v101
    %v104 = vadd.f32 %v93, %v103
    %s105 = sld [smem:[#allocation7 + $0x3]]
    %v106 = vstv %s105
    %v107 = vmul.f32 %v106, %v72
    %s108 = sld [smem:[#allocation8 + $0x3]]
    %v109 = vstv %s108
    %v110 = vadd.f32 %v107, %v109
    %s111 = sld [smem:[#allocation10 + $0x3]]
    %v112 = vtanh.pop %v110
    %v113 = vstv %s111
    %v114 = vmul.f32 %v113, %v112
    %v115 = vadd.f32 %v104, %v114
    %s116 = sld [smem:[#allocation2]]
    %v117 = vstv %s116
    %v118 = vadd.f32 %v115, %v117
    %119 = vst [vmem:[#allocation11] sm:$0xff] %v118
    // Predicated region
    $region38: #{tpu_custom_call.1} parent=1 // pred_check
      _
    $region39: #{tpu_custom_call.1} parent=1 // pred_check_branch
      %121 = sbr.rel (0) target = $region41
    $region40: #{tpu_custom_call.1} parent=1 // pred_region
      %123 = vsyncadd [#allocation5], 0
      %s125 = sshll.u32 [#allocation11], 4
      %s126 = int_to_ptr.vmem [resolvable:$true] %s125
      %s127 = sshll.u32 %s5, 4
      %s128 = int_to_ptr.hbm [resolvable:$true] %s127
      %130 = dma.vmem_to_hbm [thread:$0]  %s126, 128, %s128, [#allocation5]
    $region41: #{tpu_custom_call.1} parent=1 // pred_fallthru
      _
    // Predicated region
    $region42: #{tpu_custom_call.1} parent=1 // pred_check
      _
    $region43: #{tpu_custom_call.1} parent=1 // pred_check_branch
      %132 = sbr.rel (0) target = $region45
    $region44: #{tpu_custom_call.1} parent=1 // pred_region
      %134 = dma.done [#allocation5], 128
    $region45: #{tpu_custom_call.1} parent=1 // pred_fallthru
      _
    %135 = vsyncpa [#allocation4], 1
    %136 = vsyncpa [#allocation5], 1
    %137 = vsyncpa [#allocation6], 1
    %138 = vsyncpa [#allocation9], 1

</llo_original>
